<compile_context>
chip_gen: v7x
topology: tpu7x:2x2x1
jax: 0.10.0
libtpu: 0.0.40
codegen_flags: <defaults>
</compile_context>

<pallas_src>
import jax
import jax.numpy as jnp
from jax.experimental import pallas as pl
from jax.experimental.pallas import tpu as pltpu


# ---------------------------------------------------------------------------
# One-time parameter prep (do NOT transpose weights on every forward call).
# PyTorch nn.Linear stores weight as [out, in]; the kernels want [in, out].
# ---------------------------------------------------------------------------
def prep_params(A_w, R_w, B_w):
    wa = jnp.asarray(A_w).T  # [I, H]
    wr = jnp.asarray(R_w).T  # [H, H]
    wb = jnp.asarray(B_w).T  # [H, O]
    return (wa, wr, wb)


# ---------------------------------------------------------------------------
# Single-step kernel: exactly Vanilla_RNN.forward(x, h) -> (y, h_update)
# ---------------------------------------------------------------------------
def _rnn_step_kernel(x_ref, h_ref, wa_ref, wr_ref, wb_ref, y_ref, hout_ref):
    pre = (jnp.dot(h_ref[...], wr_ref[...], preferred_element_type=jnp.float32)
           + jnp.dot(x_ref[...], wa_ref[...], preferred_element_type=jnp.float32))
    h_new = jnp.tanh(pre)                                   # EUP transcendental
    hout_ref[...] = h_new.astype(hout_ref.dtype)
    y_ref[...] = jnp.dot(h_new, wb_ref[...],
                         preferred_element_type=jnp.float32).astype(y_ref.dtype)


@jax.jit
def vanilla_rnn_step(x, h, params):
    """x: [B, I], h: [B, H]; params from prep_params. Returns (y, h_update)."""
    wa, wr, wb = params
    Bsz, _ = x.shape
    H = h.shape[1]
    O = wb.shape[1]
    vmem = pl.BlockSpec(memory_space=pltpu.MemorySpace.VMEM)
    y, h_new = pl.pallas_call(
        _rnn_step_kernel,
        out_shape=(jax.ShapeDtypeStruct((Bsz, O), jnp.float32),
                   jax.ShapeDtypeStruct((Bsz, H), jnp.float32)),
        in_specs=[vmem, vmem, vmem, vmem, vmem],
        out_specs=(vmem, vmem),
    )(x, h, wa, wr, wb)
    return y, h_new


# ---------------------------------------------------------------------------
# Fused-sequence kernel: T forward steps in one pallas_call.
# Grid = (batch_tiles [parallel], T [arbitrary]).  The hidden-state output
# block has a constant index along t, so it stays VMEM-resident and acts as
# the recurrent carry; weights are VMEM-resident via constant index_maps.
# ---------------------------------------------------------------------------
def _rnn_seq_kernel(h0_ref, xa_ref, wr_ref, wb_ref, y_ref, hlast_ref):
    t = pl.program_id(1)

    @pl.when(t == 0)
    def _():
        hlast_ref[...] = h0_ref[...]

    h = hlast_ref[...]
    # Only the recurrent matmul is serial; x @ A^T arrives precomputed (xa).
    h_new = jnp.tanh(
        jnp.dot(h, wr_ref[...], preferred_element_type=jnp.float32) + xa_ref[0])
    hlast_ref[...] = h_new.astype(hlast_ref.dtype)
    y_ref[0] = jnp.dot(h_new, wb_ref[...],
                       preferred_element_type=jnp.float32).astype(y_ref.dtype)


@jax.jit
def vanilla_rnn_sequence(x_seq, h0, params):
    """Run T chained forward steps (as Vanilla_RNN.perturb's inner loop does).

    x_seq: [T, B, I], h0: [B, H].
    Returns (y_seq [T, B, O], h_T [B, H])."""
    wa, wr, wb = params
    T, Bsz, I = x_seq.shape
    H = h0.shape[1]
    O = wb.shape[1]

    # Hoist the non-recurrent input projection out of the serial path:
    # one well-shaped bulk matmul instead of T tiny ones inside the loop.
    xa_seq = jnp.dot(x_seq.reshape(T * Bsz, I), wa,
                     precision=jax.lax.Precision.HIGHEST,
                     preferred_element_type=jnp.float32).reshape(T, Bsz, H)

    # Batch tiling: single tile at tiny B; 8-row sublane tiles if B grows.
    # The "parallel" leading axis lets v7x's 2 TensorCores split batch tiles.
    bt = Bsz if (Bsz < 8 or Bsz % 8) else 8
    n_bt = Bsz // bt

    y_seq, h_last = pl.pallas_call(
        _rnn_seq_kernel,
        out_shape=(jax.ShapeDtypeStruct((T, Bsz, O), jnp.float32),
                   jax.ShapeDtypeStruct((Bsz, H), jnp.float32)),
        grid=(n_bt, T),
        in_specs=[
            pl.BlockSpec((bt, H), lambda b, t: (b, 0)),        # h0 (per b-tile)
            pl.BlockSpec((1, bt, H), lambda b, t: (t, b, 0)),  # x @ A^T, per step
            pl.BlockSpec((H, H), lambda b, t: (0, 0)),         # R^T, VMEM-resident
            pl.BlockSpec((H, O), lambda b, t: (0, 0)),         # B^T, VMEM-resident
        ],
        out_specs=(
            pl.BlockSpec((1, bt, O), lambda b, t: (t, b, 0)),  # y_t per step
            pl.BlockSpec((bt, H), lambda b, t: (b, 0)),        # carried h state
        ),
        compiler_params=pltpu.CompilerParams(
            dimension_semantics=("parallel", "arbitrary")),
    )(h0, xa_seq, wr, wb)
    return y_seq, h_last


# ---------------------------------------------------------------------------
# Pure-JAX reference (matches the PyTorch module).
# ---------------------------------------------------------------------------
def vanilla_rnn_ref_step(x, h, A_w, R_w, B_w):
    h_new = jnp.tanh(h @ R_w.T + x @ A_w.T)
    y = h_new @ B_w.T
    return y, h_new


if __name__ == "__main__":
    # Shapes implied by the module: input_size=16, hidden_size=32, output_size=8.
    batch, input_size, hidden_size, output_size = 2, 16, 32, 8
    seq_len = 8

    key = jax.random.PRNGKey(0)
    kx, kxs, kh, ka, kr, kb = jax.random.split(key, 6)

    x = jax.random.normal(kx, (batch, input_size), dtype=jnp.float32)
    x_seq = jax.random.normal(kxs, (seq_len, batch, input_size), dtype=jnp.float32)
    h0 = jax.random.normal(kh, (batch, hidden_size), dtype=jnp.float32)

    # Deterministic parameter init (nn.Linear-style uniform scaling, no bias).
    A_w = jax.random.uniform(ka, (hidden_size, input_size), jnp.float32,
                             minval=-1.0, maxval=1.0) / jnp.sqrt(input_size)
    R_w = jax.random.uniform(kr, (hidden_size, hidden_size), jnp.float32,
                             minval=-1.0, maxval=1.0) / jnp.sqrt(hidden_size)
    B_w = jax.random.uniform(kb, (output_size, hidden_size), jnp.float32,
                             minval=-1.0, maxval=1.0) / jnp.sqrt(hidden_size)

    params = prep_params(A_w, R_w, B_w)   # one-time [in,out] layout, not per call

    # --- single step: matches Vanilla_RNN.forward(x, h) exactly -------------
    y, h1 = vanilla_rnn_step(x, h0, params)
    jax.block_until_ready((y, h1))
    y_ref, h1_ref = vanilla_rnn_ref_step(x, h0, A_w, R_w, B_w)
    assert jnp.allclose(y, y_ref, atol=1e-5, rtol=1e-5)
    assert jnp.allclose(h1, h1_ref, atol=1e-5, rtol=1e-5)

    # --- fused rollout: T chained steps in ONE pallas_call -------------------
    y_seq, h_last = vanilla_rnn_sequence(x_seq, h0, params)
    jax.block_until_ready((y_seq, h_last))

    h_r = h0
    ys = []
    for t in range(seq_len):
        y_t, h_r = vanilla_rnn_ref_step(x_seq[t], h_r, A_w, R_w, B_w)
        ys.append(y_t)
    y_seq_ref = jnp.stack(ys, axis=0)
    assert jnp.allclose(y_seq, y_seq_ref, atol=1e-4, rtol=1e-4)
    assert jnp.allclose(h_last, h_r, atol=1e-4, rtol=1e-4)

    # TODO(synk): `perturb` itself is a host-side numpy analysis loop over eps;
    # its inner 30-step rollout is exactly what vanilla_rnn_sequence computes
    # (x_seq = [point, 0, ..., 0]), so only the outer Python loop stays on host.
    print("KERNEL_OK")
</pallas_src>

<mosaic_0001>
module attributes {stable_mosaic.version = 11 : i64} {
  func.func @_rnn_step_kernel(%arg0: memref<2x16xf32, #tpu.memory_space<vmem>>, %arg1: memref<2x32xf32, #tpu.memory_space<vmem>>, %arg2: memref<16x32xf32, #tpu.memory_space<vmem>>, %arg3: memref<32x32xf32, #tpu.memory_space<vmem>>, %arg4: memref<32x8xf32, #tpu.memory_space<vmem>>, %arg5: memref<2x8xf32, #tpu.memory_space<vmem>>, %arg6: memref<2x32xf32, #tpu.memory_space<vmem>>) attributes {dimension_semantics = [], scalar_prefetch = 0 : i64, scratch_operands = 0 : i64, tpu.core_type = #tpu.core_type<tc>} {
    %c0 = arith.constant 0 : index
    %c0_0 = arith.constant 0 : index
    %0 = vector.load %arg1[%c0, %c0_0] : memref<2x32xf32, #tpu.memory_space<vmem>>, vector<2x32xf32>
    %c0_1 = arith.constant 0 : index
    %c0_2 = arith.constant 0 : index
    %1 = vector.load %arg3[%c0_1, %c0_2] : memref<32x32xf32, #tpu.memory_space<vmem>>, vector<32x32xf32>
    %cst = arith.constant dense<0.000000e+00> : vector<2x32xf32>
    %2 = tpu.matmul %0, %1, %cst {dimension_numbers = #tpu.dot_dimension_numbers<[1], [0], [0], [1], [0, 0, 1, 1], [], []>} : vector<2x32xf32>, vector<32x32xf32>, vector<2x32xf32> -> vector<2x32xf32>
    %c0_3 = arith.constant 0 : index
    %c0_4 = arith.constant 0 : index
    %3 = vector.load %arg0[%c0_3, %c0_4] : memref<2x16xf32, #tpu.memory_space<vmem>>, vector<2x16xf32>
    %c0_5 = arith.constant 0 : index
    %c0_6 = arith.constant 0 : index
    %4 = vector.load %arg2[%c0_5, %c0_6] : memref<16x32xf32, #tpu.memory_space<vmem>>, vector<16x32xf32>
    %cst_7 = arith.constant dense<0.000000e+00> : vector<2x32xf32>
    %5 = tpu.matmul %3, %4, %cst_7 {dimension_numbers = #tpu.dot_dimension_numbers<[1], [0], [0], [1], [0, 0, 1, 1], [], []>} : vector<2x16xf32>, vector<16x32xf32>, vector<2x32xf32> -> vector<2x32xf32>
    %6 = arith.addf %2, %5 : vector<2x32xf32>
    %7 = math.tanh %6 : vector<2x32xf32>
    %c0_8 = arith.constant 0 : index
    %c0_9 = arith.constant 0 : index
    %8 = vector.load %arg6[%c0_8, %c0_9] : memref<2x32xf32, #tpu.memory_space<vmem>>, vector<2x32xf32>
    tpu.vector_store %arg6[%c0_8, %c0_9], %7 {strides = array<i32>} : memref<2x32xf32, #tpu.memory_space<vmem>>, vector<2x32xf32>,
    %c0_10 = arith.constant 0 : index
    %c0_11 = arith.constant 0 : index
    %9 = vector.load %arg4[%c0_10, %c0_11] : memref<32x8xf32, #tpu.memory_space<vmem>>, vector<32x8xf32>
    %cst_12 = arith.constant dense<0.000000e+00> : vector<2x8xf32>
    %10 = tpu.matmul %7, %9, %cst_12 {dimension_numbers = #tpu.dot_dimension_numbers<[1], [0], [0], [1], [0, 0, 1, 1], [], []>} : vector<2x32xf32>, vector<32x8xf32>, vector<2x8xf32> -> vector<2x8xf32>
    %c0_13 = arith.constant 0 : index
    %c0_14 = arith.constant 0 : index
    %11 = vector.load %arg5[%c0_13, %c0_14] : memref<2x8xf32, #tpu.memory_space<vmem>>, vector<2x8xf32>
    tpu.vector_store %arg5[%c0_13, %c0_14], %10 {strides = array<i32>} : memref<2x8xf32, #tpu.memory_space<vmem>>, vector<2x8xf32>,
    return
  }
}

</mosaic_0001>

<llo_original>
// kernel: vanilla_rnn_step.1
$region0: #{vanilla_rnn_step.1}
  #allocation0 [shape = 'u32[]', space=smem, size = 0x4, offset = 0x4, fixed_abs, tag = 'smem constant byte address 0x4 - core index']
  #allocation1 [shape = 'u32[144,128]{1,0:T(1,128)}', space=vmem, size = 0x12000, scoped, tag = 'internal scratch']
  %s0 = inlined_call_operand.vmem [shape: f32[2,16], index: 0, kind: input, shape index: {}]
  %s1 = inlined_call_operand.hbm [shape: f32[2,32], index: 1, kind: input, shape index: {}]
  %s2 = inlined_call_operand.vmem [shape: f32[16,32], index: 2, kind: input, shape index: {}]
  %s3 = inlined_call_operand.vmem [shape: f32[32,32], index: 3, kind: input, shape index: {}]
  %s4 = inlined_call_operand.vmem [shape: f32[32,8], index: 4, kind: input, shape index: {}]
  %s5 = inlined_call_operand.hbm [shape: f32[2,8], index: 5, kind: output, shape index: {0}]
  %s6 = inlined_call_operand.hbm [shape: f32[2,32], index: 6, kind: output, shape index: {1}]
  %7 = xla_tuple %s5, %s6
  %s8 = sld [smem:[#allocation0]]
  $region42: #{vanilla_rnn_step.1} parent=0
    _
  %s10 = ssub.s32 1, %s8
  %s11 = scalar_select 0, %s10, %s8
  $region1: #{vanilla_rnn_step.1} parent=0
    #allocation2 [shape = 'u8[1024]{0}', space=vmem, size = 0x400, scoped, tag = 'input window, operand 1, single buffered']
    #allocation3 [shape = 's32[1]{0}', space=sflag, size = 0x4, scoped, tag = 'scoped memory for vanilla_rnn_step.1']
    #allocation4 [shape = 's32[1]{0}', space=sflag, size = 0x4, scoped, tag = 'scoped memory for vanilla_rnn_step.1']
    #allocation5 [shape = 'u8[1024]{0}', space=vmem, size = 0x400, scoped, tag = 'output window, operand 0, single buffered']
    #allocation6 [shape = 'u8[1024]{0}', space=vmem, size = 0x400, scoped, tag = 'output window, operand 1, single buffered']
    #allocation7 [shape = 's32[1]{0}', space=sflag, size = 0x4, scoped, tag = 'scoped memory for vanilla_rnn_step.1']
    %12 = vsyncpa [#allocation3], 0
    %13 = vsyncpa [#allocation4], 0
    %14 = vsyncpa [#allocation7], 0
    // Predicated region
    $region2: #{vanilla_rnn_step.1} parent=1 // pred_check
      _
    $region3: #{vanilla_rnn_step.1} parent=1 // pred_check_branch
      %16 = sbr.rel (0) target = $region5
    $region4: #{vanilla_rnn_step.1} parent=1 // pred_region
      _
    $region5: #{vanilla_rnn_step.1} parent=1 // pred_fallthru
      _
    // Predicated region
    $region6: #{vanilla_rnn_step.1} parent=1 // pred_check
      _
    $region7: #{vanilla_rnn_step.1} parent=1 // pred_check_branch
      %18 = sbr.rel (0) target = $region9
    $region8: #{vanilla_rnn_step.1} parent=1 // pred_region
      %s20 = ssub.s32 32, 32
      %21 = vsyncadd [#allocation3], %s20
      %s23 = sshll.u32 [#allocation2], 4
      %s24 = int_to_ptr.vmem [resolvable:$true] %s23
      %26 = dma.hbm_to_vmem [thread:$0]  %s1, 32, %s24, [#allocation3]
    $region9: #{vanilla_rnn_step.1} parent=1 // pred_fallthru
      _
    // Predicated region
    $region10: #{vanilla_rnn_step.1} parent=1 // pred_check
      _
    $region11: #{vanilla_rnn_step.1} parent=1 // pred_check_branch
      %28 = sbr.rel (0) target = $region13
    $region12: #{vanilla_rnn_step.1} parent=1 // pred_region
      _
    $region13: #{vanilla_rnn_step.1} parent=1 // pred_fallthru
      _
    // Predicated region
    $region14: #{vanilla_rnn_step.1} parent=1 // pred_check
      _
    $region15: #{vanilla_rnn_step.1} parent=1 // pred_check_branch
      %30 = sbr.rel (0) target = $region17
    $region16: #{vanilla_rnn_step.1} parent=1 // pred_region
      _
    $region17: #{vanilla_rnn_step.1} parent=1 // pred_fallthru
      _
    // Predicated region
    $region18: #{vanilla_rnn_step.1} parent=1 // pred_check
      _
    $region19: #{vanilla_rnn_step.1} parent=1 // pred_check_branch
      %32 = sbr.rel (0) target = $region21
    $region20: #{vanilla_rnn_step.1} parent=1 // pred_region
      _
    $region21: #{vanilla_rnn_step.1} parent=1 // pred_fallthru
      _
    // Predicated region
    $region22: #{vanilla_rnn_step.1} parent=1 // pred_check
      _
    $region23: #{vanilla_rnn_step.1} parent=1 // pred_check_branch
      %34 = sbr.rel (0) target = $region25
    $region24: #{vanilla_rnn_step.1} parent=1 // pred_region
      %35 = dma.done [#allocation3], 32
    $region25: #{vanilla_rnn_step.1} parent=1 // pred_fallthru
      _
    %v36 = vld [vmem:[#allocation2] sm:$0x3]
    %v37 = vld [vmem:[%s3] sm:$0xff]
    %v38 = vld [vmem:[%s3 + $0x8] sm:$0xff]
    %v39 = vld [vmem:[%s3 + $0x10] sm:$0xff]
    %v40 = vld [vmem:[%s3 + $0x18] sm:$0xff]
    %v41 = vld [vmem:[%s0] sm:$0x3]
    %v42 = vld [vmem:[%s2] sm:$0xff]
    %v43 = vld [vmem:[%s2 + $0x8] sm:$0xff]
    %vm44 = vcmask 130048
    %v46 = vsel %vm44, %v41, 0
    %48 = vmatprep.subr.mxu0 0.0
    %49 = vmatpush1.msra.mxu0 %v42
    %50 = vmatprep.subr.mxu0 0.0
    %51 = vmatpush1.msra.mxu0 %v43
    %52 = vmatprep.subr.mxu0 0.0
    %53 = vmatpush1.msra.mxu0 0.0
    %54 = vmatprep.subr.mxu0 0.0
    %55 = vmatpush1.msra.mxu0 0.0
    %56 = vmatprep.subr.mxu0 0.0
    %57 = vmatpush1.msra.mxu0 0.0
    %58 = vmatprep.subr.mxu0 0.0
    %59 = vmatpush1.msra.mxu0 0.0
    %60 = vmatprep.subr.mxu0 0.0
    %61 = vmatpush1.msra.mxu0 0.0
    %62 = vmatprep.subr.mxu0 0.0
    %63 = vmatpush1.msra.mxu0 0.0
    %64 = vmatprep.subr.mxu0 0.0
    %65 = vmatpush1.msra.mxu0 0.0
    %66 = vmatprep.subr.mxu0 0.0
    %67 = vmatpush1.msra.mxu0 0.0
    %68 = vmatprep.subr.mxu0 0.0
    %69 = vmatpush1.msra.mxu0 0.0
    %70 = vmatprep.subr.mxu0 0.0
    %71 = vmatpush1.msra.mxu0 0.0
    %72 = vmatprep.subr.mxu0 0.0
    %73 = vmatpush1.msra.mxu0 0.0
    %74 = vmatprep.subr.mxu0 0.0
    %75 = vmatpush1.msra.mxu0 0.0
    %76 = vmatprep.subr.mxu0 0.0
    %77 = vmatpush1.msra.mxu0 0.0
    %78 = vmatprep.subr.mxu0 0.0
    %79 = vmatpush1.msra.mxu0 0.0
    %80 = vmatprep.subr.mxu0 0.0
    %81 = vmatpush1.msra.mxu0 0.0
    %82 = vmatprep.subr.mxu0 0.0
    %83 = vmatpush1.msra.mxu0 0.0
    %84 = vmatprep.subr.mxu0 0.0
    %85 = vmatpush1.msra.mxu0 0.0
    %86 = vmatprep.subr.mxu0 0.0
    %87 = vmatpush1.msra.mxu0 0.0
    %88 = vmatprep.subr.mxu0 0.0
    %89 = vmatpush1.msra.mxu0 0.0
    %90 = vmatprep.subr.mxu0 0.0
    %91 = vmatpush1.msra.mxu0 0.0
    %92 = vmatprep.subr.mxu0 0.0
    %93 = vmatpush1.msra.mxu0 0.0
    %94 = vmatprep.subr.mxu0 0.0
    %95 = vmatpush1.msra.mxu0 0.0
    %96 = vmatprep.subr.mxu0 0.0
    %97 = vmatpush1.msra.mxu0 0.0
    %98 = vmatprep.subr.mxu0 0.0
    %99 = vmatpush1.msra.mxu0 0.0
    %100 = vmatprep.subr.mxu0 0.0
    %101 = vmatpush1.msra.mxu0 0.0
    %102 = vmatprep.subr.mxu0 0.0
    %103 = vmatpush1.msra.mxu0 0.0
    %104 = vmatprep.subr.mxu0 0.0
    %105 = vmatpush1.msra.mxu0 0.0
    %106 = vmatprep.subr.mxu0 0.0
    %107 = vmatpush1.msra.mxu0 0.0
    %108 = vmatprep.subr.mxu0 0.0
    %109 = vmatpush1.msra.mxu0 0.0
    %110 = vmatprep.subr.mxu0 0.0
    %111 = vmatpush1.msra.mxu0 0.0
    %112 = vmatprep.mubr.f32.mxu0 0.0
    %113 = vmatmul.mubr.f32.gmra.mrb[0].mxu0 %v46
    %v114 = vpop.f32.mrb[0].mxu0
    %v115 = vadd.f32 0.0, %v114
    %v116 = vpop.f32.mrb[0].mxu0
    %117 = vdwg.mxu0
    %vm118 = vcmask 261120
    %v120 = vsel %vm118, %v36, 0
    %122 = vmatprep.subr.mxu0 0.0
    %123 = vmatpush1.msra.mxu0 %v37
    %124 = vmatprep.subr.mxu0 0.0
    %125 = vmatpush1.msra.mxu0 %v38
    %126 = vmatprep.subr.mxu0 0.0
    %127 = vmatpush1.msra.mxu0 %v39
    %128 = vmatprep.subr.mxu0 0.0
    %129 = vmatpush1.msra.mxu0 %v40
    %130 = vmatprep.subr.mxu0 0.0
    %131 = vmatpush1.msra.mxu0 0.0
    %132 = vmatprep.subr.mxu0 0.0
    %133 = vmatpush1.msra.mxu0 0.0
    %134 = vmatprep.subr.mxu0 0.0
    %135 = vmatpush1.msra.mxu0 0.0
    %136 = vmatprep.subr.mxu0 0.0
    %137 = vmatpush1.msra.mxu0 0.0
    %138 = vmatprep.subr.mxu0 0.0
    %139 = vmatpush1.msra.mxu0 0.0
    %140 = vmatprep.subr.mxu0 0.0
    %141 = vmatpush1.msra.mxu0 0.0
    %142 = vmatprep.subr.mxu0 0.0
    %143 = vmatpush1.msra.mxu0 0.0
    %144 = vmatprep.subr.mxu0 0.0
    %145 = vmatpush1.msra.mxu0 0.0
    %146 = vmatprep.subr.mxu0 0.0
    %147 = vmatpush1.msra.mxu0 0.0
    %148 = vmatprep.subr.mxu0 0.0
    %149 = vmatpush1.msra.mxu0 0.0
    %150 = vmatprep.subr.mxu0 0.0
    %151 = vmatpush1.msra.mxu0 0.0
    %152 = vmatprep.subr.mxu0 0.0
    %153 = vmatpush1.msra.mxu0 0.0
    %154 = vmatprep.subr.mxu0 0.0
    %155 = vmatpush1.msra.mxu0 0.0
    %156 = vmatprep.subr.mxu0 0.0
    %157 = vmatpush1.msra.mxu0 0.0
    %158 = vmatprep.subr.mxu0 0.0
    %159 = vmatpush1.msra.mxu0 0.0
    %160 = vmatprep.subr.mxu0 0.0
    %161 = vmatpush1.msra.mxu0 0.0
    %162 = vmatprep.subr.mxu0 0.0
    %163 = vmatpush1.msra.mxu0 0.0
    %164 = vmatprep.subr.mxu0 0.0
    %165 = vmatpush1.msra.mxu0 0.0
    %166 = vmatprep.subr.mxu0 0.0
    %167 = vmatpush1.msra.mxu0 0.0
    %168 = vmatprep.subr.mxu0 0.0
    %169 = vmatpush1.msra.mxu0 0.0
    %170 = vmatprep.subr.mxu0 0.0
    %171 = vmatpush1.msra.mxu0 0.0
    %172 = vmatprep.subr.mxu0 0.0
    %173 = vmatpush1.msra.mxu0 0.0
    %174 = vmatprep.subr.mxu0 0.0
    %175 = vmatpush1.msra.mxu0 0.0
    %176 = vmatprep.subr.mxu0 0.0
    %177 = vmatpush1.msra.mxu0 0.0
    %178 = vmatprep.subr.mxu0 0.0
    %179 = vmatpush1.msra.mxu0 0.0
    %180 = vmatprep.subr.mxu0 0.0
    %181 = vmatpush1.msra.mxu0 0.0
    %182 = vmatprep.subr.mxu0 0.0
    %183 = vmatpush1.msra.mxu0 0.0
    %184 = vmatprep.subr.mxu0 0.0
    %185 = vmatpush1.msra.mxu0 0.0
    %186 = vmatprep.mubr.f32.mxu0 0.0
    %187 = vmatmul.mubr.f32.gmra.mrb[0].mxu0 %v120
    %v188 = vpop.f32.mrb[0].mxu0
    %v189 = vadd.f32 %v115, %v188
    %v190 = vpop.f32.mrb[0].mxu0
    %191 = vdwg.mxu0
    %v192 = vtanh.pop %v189
    %vm193 = vcmask 254976
    %194 = vst.msk [vmem:[#allocation6] sm:$0x3] %vm193, %v192
    %v195 = vld [vmem:[%s4] sm:$0xff]
    %v196 = vld [vmem:[%s4 + $0x8] sm:$0xff]
    %v197 = vld [vmem:[%s4 + $0x10] sm:$0xff]
    %v198 = vld [vmem:[%s4 + $0x18] sm:$0xff]
    %v200 = vsel %vm118, %v192, 0
    %202 = vmatprep.subr.mxu0 0.0
    %203 = vmatpush1.msra.mxu0 %v195
    %204 = vmatprep.subr.mxu0 0.0
    %205 = vmatpush1.msra.mxu0 %v196
    %206 = vmatprep.subr.mxu0 0.0
    %207 = vmatpush1.msra.mxu0 %v197
    %208 = vmatprep.subr.mxu0 0.0
    %209 = vmatpush1.msra.mxu0 %v198
    %210 = vmatprep.subr.mxu0 0.0
    %211 = vmatpush1.msra.mxu0 0.0
    %212 = vmatprep.subr.mxu0 0.0
    %213 = vmatpush1.msra.mxu0 0.0
    %214 = vmatprep.subr.mxu0 0.0
    %215 = vmatpush1.msra.mxu0 0.0
    %216 = vmatprep.subr.mxu0 0.0
    %217 = vmatpush1.msra.mxu0 0.0
    %218 = vmatprep.subr.mxu0 0.0
    %219 = vmatpush1.msra.mxu0 0.0
    %220 = vmatprep.subr.mxu0 0.0
    %221 = vmatpush1.msra.mxu0 0.0
    %222 = vmatprep.subr.mxu0 0.0
    %223 = vmatpush1.msra.mxu0 0.0
    %224 = vmatprep.subr.mxu0 0.0
    %225 = vmatpush1.msra.mxu0 0.0
    %226 = vmatprep.subr.mxu0 0.0
    %227 = vmatpush1.msra.mxu0 0.0
    %228 = vmatprep.subr.mxu0 0.0
    %229 = vmatpush1.msra.mxu0 0.0
    %230 = vmatprep.subr.mxu0 0.0
    %231 = vmatpush1.msra.mxu0 0.0
    %232 = vmatprep.subr.mxu0 0.0
    %233 = vmatpush1.msra.mxu0 0.0
    %234 = vmatprep.subr.mxu0 0.0
    %235 = vmatpush1.msra.mxu0 0.0
    %236 = vmatprep.subr.mxu0 0.0
    %237 = vmatpush1.msra.mxu0 0.0
    %238 = vmatprep.subr.mxu0 0.0
    %239 = vmatpush1.msra.mxu0 0.0
    %240 = vmatprep.subr.mxu0 0.0
    %241 = vmatpush1.msra.mxu0 0.0
    %242 = vmatprep.subr.mxu0 0.0
    %243 = vmatpush1.msra.mxu0 0.0
    %244 = vmatprep.subr.mxu0 0.0
    %245 = vmatpush1.msra.mxu0 0.0
    %246 = vmatprep.subr.mxu0 0.0
    %247 = vmatpush1.msra.mxu0 0.0
    %248 = vmatprep.subr.mxu0 0.0
    %249 = vmatpush1.msra.mxu0 0.0
    %250 = vmatprep.subr.mxu0 0.0
    %251 = vmatpush1.msra.mxu0 0.0
    %252 = vmatprep.subr.mxu0 0.0
    %253 = vmatpush1.msra.mxu0 0.0
    %254 = vmatprep.subr.mxu0 0.0
    %255 = vmatpush1.msra.mxu0 0.0
    %256 = vmatprep.subr.mxu0 0.0
    %257 = vmatpush1.msra.mxu0 0.0
    %258 = vmatprep.subr.mxu0 0.0
    %259 = vmatpush1.msra.mxu0 0.0
    %260 = vmatprep.subr.mxu0 0.0
    %261 = vmatpush1.msra.mxu0 0.0
    %262 = vmatprep.subr.mxu0 0.0
    %263 = vmatpush1.msra.mxu0 0.0
    %264 = vmatprep.subr.mxu0 0.0
    %265 = vmatpush1.msra.mxu0 0.0
    %266 = vmatprep.mubr.f32.mxu0 0.0
    %267 = vmatmul.mubr.f32.gmra.mrb[0].mxu0 %v200
    %v268 = vpop.f32.mrb[0].mxu0
    %v269 = vadd.f32 0.0, %v268
    %v270 = vpop.f32.mrb[0].mxu0
    %271 = vdwg.mxu0
    %vm272 = vcmask 58368
    %273 = vst.msk [vmem:[#allocation5] sm:$0x3] %vm272, %v269
    // Predicated region
    $region26: #{vanilla_rnn_step.1} parent=1 // pred_check
      _
    $region27: #{vanilla_rnn_step.1} parent=1 // pred_check_branch
      %275 = sbr.rel (0) target = $region29
    $region28: #{vanilla_rnn_step.1} parent=1 // pred_region
      %s277 = ssub.s32 32, 32
      %278 = vsyncadd [#allocation4], %s277
      %s280 = sshll.u32 [#allocation5], 4
      %s281 = int_to_ptr.vmem [resolvable:$true] %s280
      %283 = dma.vmem_to_hbm [thread:$0]  %s281, 32, %s5, [#allocation4]
    $region29: #{vanilla_rnn_step.1} parent=1 // pred_fallthru
      _
    // Predicated region
    $region30: #{vanilla_rnn_step.1} parent=1 // pred_check
      _
    $region31: #{vanilla_rnn_step.1} parent=1 // pred_check_branch
      %285 = sbr.rel (0) target = $region33
    $region32: #{vanilla_rnn_step.1} parent=1 // pred_region
      %s287 = ssub.s32 32, 32
      %288 = vsyncadd [#allocation7], %s287
      %s290 = sshll.u32 [#allocation6], 4
      %s291 = int_to_ptr.vmem [resolvable:$true] %s290
      %293 = dma.vmem_to_hbm [thread:$0]  %s291, 32, %s6, [#allocation7]
    $region33: #{vanilla_rnn_step.1} parent=1 // pred_fallthru
      _
    // Predicated region
    $region34: #{vanilla_rnn_step.1} parent=1 // pred_check
      _
    $region35: #{vanilla_rnn_step.1} parent=1 // pred_check_branch
      %295 = sbr.rel (0) target = $region37
    $region36: #{vanilla_rnn_step.1} parent=1 // pred_region
      %296 = dma.done [#allocation4], 32
    $region37: #{vanilla_rnn_step.1} parent=1 // pred_fallthru
      _
    // Predicated region
    $region38: #{vanilla_rnn_step.1} parent=1 // pred_check
      _
    $region39: #{vanilla_rnn_step.1} parent=1 // pred_check_branch
      %298 = sbr.rel (0) target = $region41
    $region40: #{vanilla_rnn_step.1} parent=1 // pred_region
      %299 = dma.done [#allocation7], 32
    $region41: #{vanilla_rnn_step.1} parent=1 // pred_fallthru
      _
    %300 = vsyncpa [#allocation3], 1
    %301 = vsyncpa [#allocation4], 1
    %302 = vsyncpa [#allocation7], 1

</llo_original>
